<compile_context>
chip_gen: v7x
topology: tpu7x:2x2x1
jax: 0.10.0
libtpu: 0.0.40
codegen_flags: <defaults>
</compile_context>

<pallas_src>
import math

import jax
import jax.numpy as jnp
from jax.experimental import pallas as pl
from jax.experimental.pallas import tpu as pltpu


def _round_up(x, m):
    return (x + m - 1) // m * m


_CONTRACT_LAST = (((1,), (1,)), ((), ()))  # contract last dims, no batch dims


def _delora_kernel_single(x_ref, wcat_ref, m_ref, xit_ref, bias_ref, o_ref):
    """Single-shot kernel (grid=(1,)): full contraction + fused epilogue.

    x_ref    : (batch, in_pad)    bf16  x
    wcat_ref : (out+2r, in_pad)   bf16  [W; A; A0]
    m_ref    : (out+2r, 2*out*r)  f32   fused frozen expansion [m_lin | m_gate]
    xit_ref  : (batch, out*r)     f32   xi[i,k] tiled over o (lane-dense)
    bias_ref : (1, out*r)         f32   linear.bias tiled over o
    o_ref    : (batch, out*r)     f32   lane-dense output (reshaped outside)
    """
    f32 = jnp.float32
    acc = jax.lax.dot_general(x_ref[...], wcat_ref[...], _CONTRACT_LAST,
                              preferred_element_type=f32)        # (batch, out+2r)
    res = jnp.dot(acc, m_ref[...], preferred_element_type=f32)   # (batch, 2*out*r)
    nr = o_ref.shape[-1]
    o_ref[...] = (res[:, :nr] + res[:, nr:] * xit_ref[...]
                  + bias_ref[...]).astype(o_ref.dtype)


def _delora_kernel_tiled(x_ref, wcat_ref, m_ref, xit_ref, bias_ref, o_ref,
                         acc_ref):
    """K-tiled fallback (grid=(nk,)) for in_features larger than max_kt."""
    k = pl.program_id(0)
    f32 = jnp.float32

    @pl.when(k == 0)
    def _init():
        acc_ref[...] = jnp.zeros_like(acc_ref)

    acc_ref[...] += jax.lax.dot_general(x_ref[...], wcat_ref[...],
                                        _CONTRACT_LAST,
                                        preferred_element_type=f32)

    @pl.when(k == pl.num_programs(0) - 1)
    def _finalize():
        res = jnp.dot(acc_ref[...], m_ref[...], preferred_element_type=f32)
        nr = o_ref.shape[-1]
        o_ref[...] = (res[:, :nr] + res[:, nr:] * xit_ref[...]
                      + bias_ref[...]).astype(o_ref.dtype)


def make_delora_forward(W, A, B, A0, B0, lam, lam0, lin_bias, *, r,
                        eps=1e-6, max_kt=8192):
    """One-time prep of all frozen operands; returns a jitted forward(x)."""
    f32, bf16 = jnp.float32, jnp.bfloat16
    out_f, in_f = W.shape
    assert out_f == r, "reference bias broadcast requires out_features == r"
    assert max_kt % 128 == 0

    W32, A32, B32 = W.astype(f32), A.astype(f32), B.astype(f32)
    A032, B032 = A0.astype(f32), B0.astype(f32)
    bias32 = lin_bias.astype(f32)

    # ---- frozen scalars / small matrices (never recomputed per call) -------
    norm_W = jnp.sqrt(jnp.sum(W32 * W32))                   # ||W||_F
    c1 = lam * norm_W / r
    c0 = lam0 * norm_W / r
    norm_b = jnp.sqrt(jnp.sum(B32 * B32, axis=0))           # (r,)  ||B[:,m]||
    norm_a = jnp.sqrt(jnp.sum(A32 * A32, axis=1))           # (r,)  ||A[i,:]||
    xiT = 1.0 / (norm_b[:, None] * norm_a[None, :] + eps)   # xiT[k,i] = xi[i,k]
    norm_b0 = jnp.sqrt(jnp.sum(B032 * B032, axis=0))
    norm_a0 = jnp.sqrt(jnp.sum(A032 * A032, axis=1))
    xi0 = 1.0 / (norm_b0 * norm_a0 + eps)                   # (r,)

    nr = out_f * r                                          # lane-dense width
    rows = out_f + 2 * r

    # Fused epilogue expansion matrix (f32 on purpose; see header).
    #   acc = x @ [W; A; A0].T :
    #     cols [0,out)        -> (W  x.T).T
    #     cols [out,out+r)    -> (A  x.T).T
    #     cols [out+r,out+2r) -> (A0 x.T).T
    eye_exp = jnp.repeat(jnp.eye(out_f, dtype=f32), r, axis=1)           # (out, out*r)
    zeros_o = jnp.zeros((out_f, nr), f32)
    zeros_r = jnp.zeros((r, nr), f32)
    m_lin = jnp.concatenate(
        [eye_exp,
         zeros_r,
         jnp.repeat(-(c0 * B032 * xi0[None, :]).T, r, axis=1)], axis=0)  # (rows, nr)
    m_gate = jnp.concatenate(
        [zeros_o,
         jnp.repeat((c1 * B32).T, r, axis=1),
         zeros_r], axis=0)                                               # (rows, nr)
    m_fused = jnp.concatenate([m_lin, m_gate], axis=1)                   # (rows, 2*nr)
    xit_tile = jnp.tile(xiT, (1, out_f))                                 # (r, out*r)
    bias_flat = jnp.tile(bias32, out_f).reshape(1, nr)                   # (1, out*r)

    # ---- streamed operand: [W; A; A0] in bf16, padded ONCE here ------------
    in_pad = _round_up(in_f, 128)
    if in_pad <= max_kt:
        kt = in_pad          # collapse the K grid: one step for typical sizes
    else:
        kt = max_kt
        in_pad = _round_up(in_f, kt)
    nk = in_pad // kt

    wcat_b = jnp.concatenate([W32, A32, A032], axis=0).astype(bf16)      # (rows, in)
    if in_pad != in_f:
        wcat_b = jnp.pad(wcat_b, ((0, 0), (0, in_pad - in_f)))

    batch = r  # reference broadcasting requires batch == r

    in_specs = [
        pl.BlockSpec((batch, kt), lambda k: (0, k)),      # x        (streamed over K)
        pl.BlockSpec((rows, kt), lambda k: (0, k)),       # [W;A;A0] (streamed over K)
        pl.BlockSpec((rows, 2 * nr), lambda k: (0, 0)),   # fused expansion (resident)
        pl.BlockSpec((batch, nr), lambda k: (0, 0)),      # xi tile  (resident)
        pl.BlockSpec((1, nr), lambda k: (0, 0)),          # bias     (resident)
    ]
    out_specs = pl.BlockSpec((batch, nr), lambda k: (0, 0))

    if nk == 1:
        kernel = _delora_kernel_single
        scratch = []                                   # no accumulator needed
    else:
        kernel = _delora_kernel_tiled
        scratch = [pltpu.VMEM((batch, rows), f32)]     # f32 accumulator

    call = pl.pallas_call(
        kernel,
        out_shape=jax.ShapeDtypeStruct((batch, nr), f32),
        grid_spec=pltpu.PrefetchScalarGridSpec(
            num_scalar_prefetch=0,
            grid=(nk,),
            in_specs=in_specs,
            out_specs=out_specs,
            scratch_shapes=scratch),
        compiler_params=pltpu.CompilerParams(
            dimension_semantics=("arbitrary",)),       # K is a reduction axis
    )
    # TODO(synk): on v7x, batch several independent adapters/layers into one
    # pallas_call with a leading "parallel" grid axis to use both TensorCores.

    @jax.jit
    def forward(x):
        assert x.ndim == 2 and x.shape == (batch, in_f), (
            "reference semantics require batch == r == out_features")
        xb = x.astype(bf16)
        if in_pad != in_f:
            xb = jnp.pad(xb, ((0, 0), (0, in_pad - in_f)))
        y_flat = call(xb, wcat_b, m_fused, xit_tile, bias_flat)
        # (batch, out*r) -> reference layout (batch, out, r): row-major reshape.
        return y_flat.reshape(batch, out_f, r)

    return forward


def _reference_forward(x, W, A, B, A0, B0, lam, lam0, lin_bias, r, eps):
    """Literal jnp transcription of the PyTorch forward (for validation)."""
    hi = jax.lax.Precision.HIGHEST
    A_x = jnp.matmul(A, x.T, precision=hi)
    A0_x = jnp.matmul(A0, x.T, precision=hi)
    norm_b = jnp.linalg.norm(B, axis=0)
    norm_a = jnp.linalg.norm(A, axis=1).reshape(-1, 1)
    xi = 1.0 / (norm_b * norm_a + eps)                       # (r, r)
    norm_b0 = jnp.linalg.norm(B0, axis=0)
    norm_a0 = jnp.linalg.norm(A0, axis=1)
    xi0 = 1.0 / (norm_b0 * norm_a0 + eps)                    # (r,)
    norm_W = jnp.linalg.norm(W)
    delta_y = lam * norm_W / r * jnp.matmul(B, xi[:, None] * A_x, precision=hi)
    delta_y0 = lam0 * norm_W / r * jnp.matmul(B0, xi0[:, None] * A0_x, precision=hi)
    W_x = jnp.matmul(W, x.T, precision=hi)
    y = W_x + delta_y - delta_y0
    y = jnp.transpose(y, tuple(reversed(range(y.ndim))))     # torch .T reverses dims
    return y + lin_bias


if __name__ == "__main__":
    # Small shapes consistent with the module (batch == r == out_features).
    in_features = 512
    out_features = 16
    r = 16
    batch = 16
    eps = 1e-6
    lam = 1.0       # lambda_init
    lam0 = 1.0      # lambda0 buffer (clone of lambda_init)

    key = jax.random.PRNGKey(0)
    k_w, k_lb, k_a, k_b, k_a0, k_b0, k_x = jax.random.split(key, 7)
    f32, bf16 = jnp.float32, jnp.bfloat16

    # pretrained_W == linear.weight; linear.bias present.
    W = jax.random.normal(k_w, (out_features, in_features), f32) * 0.1
    lin_bias = jax.random.normal(k_lb, (out_features,), f32) * 0.1
    # Kaiming-normal(a=sqrt(5)) std = sqrt(2/(1+5))/sqrt(fan_in) = 1/sqrt(3*fan_in)
    A = jax.random.normal(k_a, (r, in_features), f32) / math.sqrt(3 * in_features)
    B = jax.random.normal(k_b, (out_features, r), f32) / math.sqrt(3 * r)
    # TODO(synk): the torch module clones B0/A0 from *uninitialized* tensors
    # (undefined values); we use separate deterministic draws instead.
    A0 = jax.random.normal(k_a0, (r, in_features), f32) / math.sqrt(3 * in_features)
    B0 = jax.random.normal(k_b0, (out_features, r), f32) / math.sqrt(3 * r)
    x = jax.random.normal(k_x, (batch, in_features), f32)

    # The kernel streams x / W / A / A0 as bf16 MXU operands; round them once
    # here so the kernel and the f32 reference see numerically identical inputs.
    # TODO(synk): vs a true-f32 torch forward, bf16 streaming error can exceed
    # 2e-3 for non-toy weight scales.
    x = x.astype(bf16).astype(f32)
    W = W.astype(bf16).astype(f32)
    A = A.astype(bf16).astype(f32)
    A0 = A0.astype(bf16).astype(f32)

    ref = jax.block_until_ready(
        _reference_forward(x, W, A, B, A0, B0, lam, lam0, lin_bias, r, eps))

    # Common case: collapsed K grid (grid=(1,)), scratch-free kernel.
    fwd = make_delora_forward(W, A, B, A0, B0, lam, lam0, lin_bias, r=r, eps=eps)
    out = jax.block_until_ready(fwd(x))
    assert out.shape == (batch, out_features, r), out.shape
    assert bool(jnp.all(jnp.isfinite(out)))
    max_err = float(jnp.max(jnp.abs(out - ref)))
    assert bool(jnp.allclose(out, ref, rtol=2e-3, atol=2e-3)), max_err

    # Also exercise the K-tiled fallback path (nk > 1) on the same inputs.
    fwd_tiled = make_delora_forward(W, A, B, A0, B0, lam, lam0, lin_bias,
                                    r=r, eps=eps, max_kt=256)
    out_t = jax.block_until_ready(fwd_tiled(x))
    max_err_t = float(jnp.max(jnp.abs(out_t - ref)))
    assert bool(jnp.allclose(out_t, ref, rtol=2e-3, atol=2e-3)), max_err_t

    print("KERNEL_OK")
</pallas_src>

<mosaic_0001>
module attributes {stable_mosaic.version = 11 : i64} {
  func.func @_delora_kernel_single(%arg0: i32, %arg1: memref<16x512xbf16, #tpu.memory_space<vmem>>, %arg2: memref<48x512xbf16, #tpu.memory_space<vmem>>, %arg3: memref<48x512xf32, #tpu.memory_space<vmem>>, %arg4: memref<16x256xf32, #tpu.memory_space<vmem>>, %arg5: memref<1x256xf32, #tpu.memory_space<vmem>>, %arg6: memref<16x256xf32, #tpu.memory_space<vmem>>) attributes {dimension_semantics = [#tpu.dimension_semantics<arbitrary>], iteration_bounds = array<i64: 1>, scalar_prefetch = 0 : i64, scratch_operands = 0 : i64, tpu.core_type = #tpu.core_type<tc>, window_params = [{transform_indices = @transform_0, window_bounds = array<i64: 16, 512>}, {transform_indices = @transform_1, window_bounds = array<i64: 48, 512>}, {pipeline_mode = #tpu.pipeline_mode<synchronous>, transform_indices = @transform_2, window_bounds = array<i64: 48, 512>}, {pipeline_mode = #tpu.pipeline_mode<synchronous>, transform_indices = @transform_3, window_bounds = array<i64: 16, 256>}, {pipeline_mode = #tpu.pipeline_mode<synchronous>, transform_indices = @transform_4, window_bounds = array<i64: 1, 256>}, {pipeline_mode = #tpu.pipeline_mode<synchronous>, transform_indices = @transform_5, window_bounds = array<i64: 16, 256>}]} {
    %c0 = arith.constant 0 : index
    %c0_0 = arith.constant 0 : index
    %0 = vector.load %arg1[%c0, %c0_0] : memref<16x512xbf16, #tpu.memory_space<vmem>>, vector<16x512xbf16>
    %c0_1 = arith.constant 0 : index
    %c0_2 = arith.constant 0 : index
    %1 = vector.load %arg2[%c0_1, %c0_2] : memref<48x512xbf16, #tpu.memory_space<vmem>>, vector<48x512xbf16>
    %cst = arith.constant dense<0.000000e+00> : vector<16x48xf32>
    %2 = tpu.matmul %0, %1, %cst {dimension_numbers = #tpu.dot_dimension_numbers<[1], [1], [0], [0], [0, 0, 1, 0], [], []>} : vector<16x512xbf16>, vector<48x512xbf16>, vector<16x48xf32> -> vector<16x48xf32>
    %c0_3 = arith.constant 0 : index
    %c0_4 = arith.constant 0 : index
    %3 = vector.load %arg3[%c0_3, %c0_4] : memref<48x512xf32, #tpu.memory_space<vmem>>, vector<48x512xf32>
    %cst_5 = arith.constant dense<0.000000e+00> : vector<16x512xf32>
    %4 = tpu.matmul %2, %3, %cst_5 {dimension_numbers = #tpu.dot_dimension_numbers<[1], [0], [0], [1], [0, 0, 1, 1], [], []>} : vector<16x48xf32>, vector<48x512xf32>, vector<16x512xf32> -> vector<16x512xf32>
    %5 = vector.extract_strided_slice %4 {offsets = [0, 0], sizes = [16, 256], strides = [1, 1]} : vector<16x512xf32> to vector<16x256xf32>
    %6 = vector.extract_strided_slice %4 {offsets = [0, 256], sizes = [16, 256], strides = [1, 1]} : vector<16x512xf32> to vector<16x256xf32>
    %c0_6 = arith.constant 0 : index
    %c0_7 = arith.constant 0 : index
    %7 = vector.load %arg4[%c0_6, %c0_7] : memref<16x256xf32, #tpu.memory_space<vmem>>, vector<16x256xf32>
    %8 = arith.mulf %6, %7 : vector<16x256xf32>
    %9 = arith.addf %5, %8 : vector<16x256xf32>
    %c0_8 = arith.constant 0 : index
    %c0_9 = arith.constant 0 : index
    %10 = vector.load %arg5[%c0_8, %c0_9] : memref<1x256xf32, #tpu.memory_space<vmem>>, vector<1x256xf32>
    %11 = vector.broadcast %10 : vector<1x256xf32> to vector<16x256xf32>
    %12 = arith.addf %9, %11 : vector<16x256xf32>
    %c0_10 = arith.constant 0 : index
    %c0_11 = arith.constant 0 : index
    %13 = vector.load %arg6[%c0_10, %c0_11] : memref<16x256xf32, #tpu.memory_space<vmem>>, vector<16x256xf32>
    tpu.vector_store %arg6[%c0_10, %c0_11], %12 {strides = array<i32>} : memref<16x256xf32, #tpu.memory_space<vmem>>, vector<16x256xf32>,
    return
  }
  func.func @transform_0(%arg0: i32) -> (i32, i32) {
    %c0_i32 = arith.constant 0 : i32
    %c0_i32_0 = arith.constant 0 : i32
    return %c0_i32, %arg0 : i32, i32
  }
  func.func @transform_1(%arg0: i32) -> (i32, i32) {
    %c0_i32 = arith.constant 0 : i32
    %c0_i32_0 = arith.constant 0 : i32
    return %c0_i32, %arg0 : i32, i32
  }
  func.func @transform_2(%arg0: i32) -> (i32, i32) {
    %c0_i32 = arith.constant 0 : i32
    %c0_i32_0 = arith.constant 0 : i32
    %c0_i32_1 = arith.constant 0 : i32
    return %c0_i32, %c0_i32_0 : i32, i32
  }
  func.func @transform_3(%arg0: i32) -> (i32, i32) {
    %c0_i32 = arith.constant 0 : i32
    %c0_i32_0 = arith.constant 0 : i32
    %c0_i32_1 = arith.constant 0 : i32
    return %c0_i32, %c0_i32_0 : i32, i32
  }
  func.func @transform_4(%arg0: i32) -> (i32, i32) {
    %c0_i32 = arith.constant 0 : i32
    %c0_i32_0 = arith.constant 0 : i32
    %c0_i32_1 = arith.constant 0 : i32
    return %c0_i32, %c0_i32_0 : i32, i32
  }
  func.func @transform_5(%arg0: i32) -> (i32, i32) {
    %c0_i32 = arith.constant 0 : i32
    %c0_i32_0 = arith.constant 0 : i32
    %c0_i32_1 = arith.constant 0 : i32
    return %c0_i32, %c0_i32_0 : i32, i32
  }
}

</mosaic_0001>

<llo_original>
// kernel: forward.1
$region0: #{forward.1}
  #allocation0 [shape = 'u32[]', space=smem, size = 0x4, offset = 0x4, fixed_abs, tag = 'smem constant byte address 0x4 - core index']
  #allocation1 [shape = 'u32[144,128]{1,0:T(1,128)}', space=vmem, size = 0x12000, scoped, tag = 'internal scratch']
  %s0 = inlined_call_operand.vmem [shape: bf16[16,512], index: 0, kind: input, shape index: {}]
  %s1 = inlined_call_operand.vmem [shape: bf16[48,512], index: 1, kind: input, shape index: {}]
  %s2 = inlined_call_operand.vmem [shape: f32[48,512], index: 2, kind: input, shape index: {}]
  %s3 = inlined_call_operand.hbm [shape: f32[16,256], index: 3, kind: input, shape index: {}]
  %s4 = inlined_call_operand.vmem [shape: f32[1,256], index: 4, kind: input, shape index: {}]
  %s5 = inlined_call_operand.vmem [shape: f32[16,256], index: 5, kind: output, shape index: {}]
  %s6 = sld [smem:[#allocation0]]
  $region34: #{forward.1} parent=0
    _
  %s8 = ssub.s32 1, %s6
  %s9 = scalar_select 0, %s8, %s6
  $region1: #{forward.1} parent=0
    #allocation2 [shape = 'u8[16384]{0}', space=vmem, size = 0x4000, scoped, tag = 'input window, operand 3, single buffered']
    #allocation3 [shape = 's32[1]{0}', space=sflag, size = 0x4, scoped, tag = 'scoped memory for forward.1']
    %10 = vsyncpa [#allocation3], 0
    // Predicated region
    $region2: #{forward.1} parent=1 // pred_check
      _
    $region3: #{forward.1} parent=1 // pred_check_branch
      %12 = sbr.rel (0) target = $region5
    $region4: #{forward.1} parent=1 // pred_region
      _
    $region5: #{forward.1} parent=1 // pred_fallthru
      _
    // Predicated region
    $region6: #{forward.1} parent=1 // pred_check
      _
    $region7: #{forward.1} parent=1 // pred_check_branch
      %14 = sbr.rel (0) target = $region9
    $region8: #{forward.1} parent=1 // pred_region
      _
    $region9: #{forward.1} parent=1 // pred_fallthru
      _
    // Predicated region
    $region10: #{forward.1} parent=1 // pred_check
      _
    $region11: #{forward.1} parent=1 // pred_check_branch
      %16 = sbr.rel (0) target = $region13
    $region12: #{forward.1} parent=1 // pred_region
      _
    $region13: #{forward.1} parent=1 // pred_fallthru
      _
    // Predicated region
    $region14: #{forward.1} parent=1 // pred_check
      _
    $region15: #{forward.1} parent=1 // pred_check_branch
      %18 = sbr.rel (0) target = $region17
    $region16: #{forward.1} parent=1 // pred_region
      %s20 = ssub.s32 512, 512
      %21 = vsyncadd [#allocation3], %s20
      %s22 = sshll.u32 [#allocation2], 4
      %s23 = int_to_ptr.vmem [resolvable:$true] %s22
      %28 = dma.hbm_to_vmem [thread:$0]  %s3, 512, %s23, [#allocation3], 256, 256, 16
    $region17: #{forward.1} parent=1 // pred_fallthru
      _
    // Predicated region
    $region18: #{forward.1} parent=1 // pred_check
      _
    $region19: #{forward.1} parent=1 // pred_check_branch
      %30 = sbr.rel (0) target = $region21
    $region20: #{forward.1} parent=1 // pred_region
      _
    $region21: #{forward.1} parent=1 // pred_fallthru
      _
    // Predicated region
    $region22: #{forward.1} parent=1 // pred_check
      _
    $region23: #{forward.1} parent=1 // pred_check_branch
      %32 = sbr.rel (0) target = $region25
    $region24: #{forward.1} parent=1 // pred_region
      %33 = dma.done [#allocation3], 512
    $region25: #{forward.1} parent=1 // pred_fallthru
      _
    %v35 = vld [vmem:[%s0] sm:$0xff]
    %v36 = vld [vmem:[%s0 + $0x8] sm:$0xff]
    %v37 = vld [vmem:[%s0 + $0x10] sm:$0xff]
    %v38 = vld [vmem:[%s0 + $0x18] sm:$0xff]
    %v39 = vld [vmem:[%s1] sm:$0xff]
    %v40 = vld [vmem:[%s1 + $0x8] sm:$0xff]
    %v41 = vld [vmem:[%s1 + $0x10] sm:$0xff]
    %v42 = vld [vmem:[%s1 + $0x18] sm:$0xff]
    %v43 = vld [vmem:[%s1 + $0x20] sm:$0xff]
    %v44 = vld [vmem:[%s1 + $0x28] sm:$0xff]
    %v45 = vld [vmem:[%s1 + $0x30] sm:$0xff]
    %v46 = vld [vmem:[%s1 + $0x38] sm:$0xff]
    %v47 = vld [vmem:[%s1 + $0x40] sm:$0xff]
    %v48 = vld [vmem:[%s1 + $0x48] sm:$0xff]
    %v49 = vld [vmem:[%s1 + $0x50] sm:$0xff]
    %v50 = vld [vmem:[%s1 + $0x58] sm:$0xff]
    %v55 = vunpack.c.l.b16 %v35
    %v56 = vunpack.c.h.b16 %v35
    %v57 = vunpack.c.l.b16 %v36
    %v58 = vunpack.c.h.b16 %v36
    %v59 = vunpack.c.l.b16 %v37
    %v60 = vunpack.c.h.b16 %v37
    %v61 = vunpack.c.l.b16 %v38
    %v62 = vunpack.c.h.b16 %v38
    %v63 = vpack.c.b16 %v59, %v55
    %v64 = vpack.c.b16 %v60, %v56
    %v65 = vpack.c.b16 %v61, %v57
    %v66 = vpack.c.b16 %v62, %v58
    %v83 = vunpack.c.l.b16 %v39
    %v84 = vunpack.c.h.b16 %v39
    %v85 = vunpack.c.l.b16 %v40
    %v86 = vunpack.c.h.b16 %v40
    %v87 = vunpack.c.l.b16 %v41
    %v88 = vunpack.c.h.b16 %v41
    %v89 = vunpack.c.l.b16 %v42
    %v90 = vunpack.c.h.b16 %v42
    %v91 = vunpack.c.l.b16 %v43
    %v92 = vunpack.c.h.b16 %v43
    %v93 = vunpack.c.l.b16 %v44
    %v94 = vunpack.c.h.b16 %v44
    %v95 = vunpack.c.l.b16 %v45
    %v96 = vunpack.c.h.b16 %v45
    %v97 = vunpack.c.l.b16 %v46
    %v98 = vunpack.c.h.b16 %v46
    %v99 = vunpack.c.l.b16 %v47
    %v100 = vunpack.c.h.b16 %v47
    %v101 = vunpack.c.l.b16 %v48
    %v102 = vunpack.c.h.b16 %v48
    %v103 = vunpack.c.l.b16 %v49
    %v104 = vunpack.c.h.b16 %v49
    %v105 = vunpack.c.l.b16 %v50
    %v106 = vunpack.c.h.b16 %v50
    %v107 = vpack.c.b16 %v87, %v83
    %v108 = vpack.c.b16 %v88, %v84
    %v109 = vpack.c.b16 %v89, %v85
    %v110 = vpack.c.b16 %v90, %v86
    %v111 = vpack.c.b16 %v95, %v91
    %v112 = vpack.c.b16 %v96, %v92
    %v113 = vpack.c.b16 %v97, %v93
    %v114 = vpack.c.b16 %v98, %v94
    %v115 = vpack.c.b16 %v103, %v99
    %v116 = vpack.c.b16 %v104, %v100
    %v117 = vpack.c.b16 %v105, %v101
    %v118 = vpack.c.b16 %v106, %v102
    %131 = vmatprep.subr.bf16.mxu0 %v108
    %132 = vmatpush1.bf16.xpose.msra.mxu0 %v107
    %133 = vmatprep.subr.bf16.mxu0 %v112
    %134 = vmatpush1.bf16.xpose.msra.mxu0 %v111
    %135 = vmatprep.subr.bf16.mxu0 %v116
    %136 = vmatpush1.bf16.xpose.msra.mxu0 %v115
    %137 = vmatprep.subr.bf16.mxu0 0
    %138 = vmatpush1.bf16.xpose.msra.mxu0 0
    %139 = vmatprep.subr.bf16.mxu0 0
    %140 = vmatpush1.bf16.xpose.msra.mxu0 0
    %141 = vmatprep.subr.bf16.mxu0 0
    %142 = vmatpush1.bf16.xpose.msra.mxu0 0
    %143 = vmatprep.subr.bf16.mxu0 0
    %144 = vmatpush1.bf16.xpose.msra.mxu0 0
    %145 = vmatprep.subr.bf16.mxu0 0
    %146 = vmatpush1.bf16.xpose.msra.mxu0 0
    %147 = vmatprep.subr.bf16.mxu0 0
    %148 = vmatpush1.bf16.xpose.msra.mxu0 0
    %149 = vmatprep.subr.bf16.mxu0 0
    %150 = vmatpush1.bf16.xpose.msra.mxu0 0
    %151 = vmatprep.subr.bf16.mxu0 0
    %152 = vmatpush1.bf16.xpose.msra.mxu0 0
    %153 = vmatprep.subr.bf16.mxu0 0
    %154 = vmatpush1.bf16.xpose.msra.mxu0 0
    %155 = vmatprep.subr.bf16.mxu0 0
    %156 = vmatpush1.bf16.xpose.msra.mxu0 0
    %157 = vmatprep.subr.bf16.mxu0 0
    %158 = vmatpush1.bf16.xpose.msra.mxu0 0
    %159 = vmatprep.subr.bf16.mxu0 0
    %160 = vmatpush1.bf16.xpose.msra.mxu0 0
    %161 = vmatprep.subr.bf16.mxu0 0
    %162 = vmatpush1.bf16.xpose.msra.mxu0 0
    %163 = vmatprep.mubr.bf16.mxu0 %v64
    %164 = vmatmul.mubr.bf16.gmra.mrb[0].mxu0 %v63
    %v165 = vpop.f32.mrb[0].mxu0
    %v166 = vadd.f32 0.0, %v165
    %v167 = vpop.f32.mrb[0].mxu0
    %v168 = vpop.f32.mrb[0].mxu0
    %v169 = vadd.f32 0.0, %v168
    %v170 = vpop.f32.mrb[0].mxu0
    %171 = vdwg.mxu0
    %172 = vmatprep.subr.bf16.mxu0 %v110
    %173 = vmatpush1.bf16.xpose.msra.mxu0 %v109
    %174 = vmatprep.subr.bf16.mxu0 %v114
    %175 = vmatpush1.bf16.xpose.msra.mxu0 %v113
    %176 = vmatprep.subr.bf16.mxu0 %v118
    %177 = vmatpush1.bf16.xpose.msra.mxu0 %v117
    %178 = vmatprep.subr.bf16.mxu0 0
    %179 = vmatpush1.bf16.xpose.msra.mxu0 0
    %180 = vmatprep.subr.bf16.mxu0 0
    %181 = vmatpush1.bf16.xpose.msra.mxu0 0
    %182 = vmatprep.subr.bf16.mxu0 0
    %183 = vmatpush1.bf16.xpose.msra.mxu0 0
    %184 = vmatprep.subr.bf16.mxu0 0
    %185 = vmatpush1.bf16.xpose.msra.mxu0 0
    %186 = vmatprep.subr.bf16.mxu0 0
    %187 = vmatpush1.bf16.xpose.msra.mxu0 0
    %188 = vmatprep.subr.bf16.mxu0 0
    %189 = vmatpush1.bf16.xpose.msra.mxu0 0
    %190 = vmatprep.subr.bf16.mxu0 0
    %191 = vmatpush1.bf16.xpose.msra.mxu0 0
    %192 = vmatprep.subr.bf16.mxu0 0
    %193 = vmatpush1.bf16.xpose.msra.mxu0 0
    %194 = vmatprep.subr.bf16.mxu0 0
    %195 = vmatpush1.bf16.xpose.msra.mxu0 0
    %196 = vmatprep.subr.bf16.mxu0 0
    %197 = vmatpush1.bf16.xpose.msra.mxu0 0
    %198 = vmatprep.subr.bf16.mxu0 0
    %199 = vmatpush1.bf16.xpose.msra.mxu0 0
    %200 = vmatprep.subr.bf16.mxu0 0
    %201 = vmatpush1.bf16.xpose.msra.mxu0 0
    %202 = vmatprep.subr.bf16.mxu0 0
    %203 = vmatpush1.bf16.xpose.msra.mxu0 0
    %204 = vmatprep.mubr.bf16.mxu0 %v66
    %205 = vmatmul.mubr.bf16.gmra.mrb[0].mxu0 %v65
    %v206 = vpop.f32.mrb[0].mxu0
    %v207 = vadd.f32 %v166, %v206
    %v208 = vpop.f32.mrb[0].mxu0
    %v209 = vpop.f32.mrb[0].mxu0
    %v210 = vadd.f32 %v169, %v209
    %v211 = vpop.f32.mrb[0].mxu0
    %212 = vdwg.mxu0
    %v213 = vld [vmem:[%s2] sm:$0xff]
    %v214 = vld [vmem:[%s2 + $0x8] sm:$0xff]
    %v215 = vld [vmem:[%s2 + $0x10] sm:$0xff]
    %v216 = vld [vmem:[%s2 + $0x18] sm:$0xff]
    %v217 = vld [vmem:[%s2 + $0x20] sm:$0xff]
    %v218 = vld [vmem:[%s2 + $0x28] sm:$0xff]
    %v219 = vld [vmem:[%s2 + $0x30] sm:$0xff]
    %v220 = vld [vmem:[%s2 + $0x38] sm:$0xff]
    %v221 = vld [vmem:[%s2 + $0x40] sm:$0xff]
    %v222 = vld [vmem:[%s2 + $0x48] sm:$0xff]
    %v223 = vld [vmem:[%s2 + $0x50] sm:$0xff]
    %v224 = vld [vmem:[%s2 + $0x58] sm:$0xff]
    %v225 = vld [vmem:[%s2 + $0x60] sm:$0xff]
    %v226 = vld [vmem:[%s2 + $0x68] sm:$0xff]
    %v227 = vld [vmem:[%s2 + $0x70] sm:$0xff]
    %v228 = vld [vmem:[%s2 + $0x78] sm:$0xff]
    %v229 = vld [vmem:[%s2 + $0x80] sm:$0xff]
    %v230 = vld [vmem:[%s2 + $0x88] sm:$0xff]
    %v231 = vld [vmem:[%s2 + $0x90] sm:$0xff]
    %v232 = vld [vmem:[%s2 + $0x98] sm:$0xff]
    %v233 = vld [vmem:[%s2 + $0xa0] sm:$0xff]
    %v234 = vld [vmem:[%s2 + $0xa8] sm:$0xff]
    %v235 = vld [vmem:[%s2 + $0xb0] sm:$0xff]
    %v236 = vld [vmem:[%s2 + $0xb8] sm:$0xff]
    %vm237 = vcmask 392192
    %v239 = vsel %vm237, %v207, 0
    %v242 = vsel %vm237, %v210, 0
    %244 = vmatprep.subr.mxu0 %v214
    %245 = vmatpush1.msra.mxu0 %v213
    %246 = vmatprep.subr.mxu0 %v218
    %247 = vmatpush1.msra.mxu0 %v217
    %248 = vmatprep.subr.mxu0 %v222
    %249 = vmatpush1.msra.mxu0 %v221
    %250 = vmatprep.subr.mxu0 %v226
    %251 = vmatpush1.msra.mxu0 %v225
    %252 = vmatprep.subr.mxu0 %v230
    %253 = vmatpush1.msra.mxu0 %v229
    %254 = vmatprep.subr.mxu0 %v234
    %255 = vmatpush1.msra.mxu0 %v233
    %256 = vmatprep.subr.mxu0 0.0
    %257 = vmatpush1.msra.mxu0 0.0
    %258 = vmatprep.subr.mxu0 0.0
    %259 = vmatpush1.msra.mxu0 0.0
    %260 = vmatprep.subr.mxu0 0.0
    %261 = vmatpush1.msra.mxu0 0.0
    %262 = vmatprep.subr.mxu0 0.0
    %263 = vmatpush1.msra.mxu0 0.0
    %264 = vmatprep.subr.mxu0 0.0
    %265 = vmatpush1.msra.mxu0 0.0
    %266 = vmatprep.subr.mxu0 0.0
    %267 = vmatpush1.msra.mxu0 0.0
    %268 = vmatprep.subr.mxu0 0.0
    %269 = vmatpush1.msra.mxu0 0.0
    %270 = vmatprep.subr.mxu0 0.0
    %271 = vmatpush1.msra.mxu0 0.0
    %272 = vmatprep.subr.mxu0 0.0
    %273 = vmatpush1.msra.mxu0 0.0
    %274 = vmatprep.subr.mxu0 0.0
    %275 = vmatpush1.msra.mxu0 0.0
    %276 = vmatprep.subr.mxu0 0.0
    %277 = vmatpush1.msra.mxu0 0.0
    %278 = vmatprep.subr.mxu0 0.0
    %279 = vmatpush1.msra.mxu0 0.0
    %280 = vmatprep.subr.mxu0 0.0
    %281 = vmatpush1.msra.mxu0 0.0
    %282 = vmatprep.subr.mxu0 0.0
    %283 = vmatpush1.msra.mxu0 0.0
    %284 = vmatprep.subr.mxu0 0.0
    %285 = vmatpush1.msra.mxu0 0.0
    %286 = vmatprep.subr.mxu0 0.0
    %287 = vmatpush1.msra.mxu0 0.0
    %288 = vmatprep.subr.mxu0 0.0
    %289 = vmatpush1.msra.mxu0 0.0
    %290 = vmatprep.subr.mxu0 0.0
    %291 = vmatpush1.msra.mxu0 0.0
    %292 = vmatprep.subr.mxu0 0.0
    %293 = vmatpush1.msra.mxu0 0.0
    %294 = vmatprep.subr.mxu0 0.0
    %295 = vmatpush1.msra.mxu0 0.0
    %296 = vmatprep.subr.mxu0 0.0
    %297 = vmatpush1.msra.mxu0 0.0
    %298 = vmatprep.subr.mxu0 0.0
    %299 = vmatpush1.msra.mxu0 0.0
    %300 = vmatprep.subr.mxu0 0.0
    %301 = vmatpush1.msra.mxu0 0.0
    %302 = vmatprep.subr.mxu0 0.0
    %303 = vmatpush1.msra.mxu0 0.0
    %304 = vmatprep.subr.mxu0 0.0
    %305 = vmatpush1.msra.mxu0 0.0
    %306 = vmatprep.subr.mxu0 0.0
    %307 = vmatpush1.msra.mxu0 0.0
    %308 = vmatprep.mubr.f32.mxu0 0.0
    %309 = vmatmul.mubr.f32.gmra.mrb[0].mxu0 %v239
    %v310 = vpop.f32.mrb[0].mxu0
    %v311 = vadd.f32 0.0, %v310
    %v312 = vpop.f32.mrb[0].mxu0
    %v313 = vadd.f32 0.0, %v312
    %314 = vmatprep.mubr.f32.mxu0 0.0
    %315 = vmatmul.mubr.f32.gmra.mrb[0].mxu0 %v242
    %v316 = vpop.f32.mrb[0].mxu0
    %v317 = vadd.f32 0.0, %v316
    %v318 = vpop.f32.mrb[0].mxu0
    %v319 = vadd.f32 0.0, %v318
    %320 = vdwg.mxu0
    %321 = vmatprep.subr.mxu0 %v216
    %322 = vmatpush1.msra.mxu0 %v215
    %323 = vmatprep.subr.mxu0 %v220
    %324 = vmatpush1.msra.mxu0 %v219
    %325 = vmatprep.subr.mxu0 %v224
    %326 = vmatpush1.msra.mxu0 %v223
    %327 = vmatprep.subr.mxu0 %v228
    %328 = vmatpush1.msra.mxu0 %v227
    %329 = vmatprep.subr.mxu0 %v232
    %330 = vmatpush1.msra.mxu0 %v231
    %331 = vmatprep.subr.mxu0 %v236
    %332 = vmatpush1.msra.mxu0 %v235
    %333 = vmatprep.subr.mxu0 0.0
    %334 = vmatpush1.msra.mxu0 0.0
    %335 = vmatprep.subr.mxu0 0.0
    %336 = vmatpush1.msra.mxu0 0.0
    %337 = vmatprep.subr.mxu0 0.0
    %338 = vmatpush1.msra.mxu0 0.0
    %339 = vmatprep.subr.mxu0 0.0
    %340 = vmatpush1.msra.mxu0 0.0
    %341 = vmatprep.subr.mxu0 0.0
    %342 = vmatpush1.msra.mxu0 0.0
    %343 = vmatprep.subr.mxu0 0.0
    %344 = vmatpush1.msra.mxu0 0.0
    %345 = vmatprep.subr.mxu0 0.0
    %346 = vmatpush1.msra.mxu0 0.0
    %347 = vmatprep.subr.mxu0 0.0
    %348 = vmatpush1.msra.mxu0 0.0
    %349 = vmatprep.subr.mxu0 0.0
    %350 = vmatpush1.msra.mxu0 0.0
    %351 = vmatprep.subr.mxu0 0.0
    %352 = vmatpush1.msra.mxu0 0.0
    %353 = vmatprep.subr.mxu0 0.0
    %354 = vmatpush1.msra.mxu0 0.0
    %355 = vmatprep.subr.mxu0 0.0
    %356 = vmatpush1.msra.mxu0 0.0
    %357 = vmatprep.subr.mxu0 0.0
    %358 = vmatpush1.msra.mxu0 0.0
    %359 = vmatprep.subr.mxu0 0.0
    %360 = vmatpush1.msra.mxu0 0.0
    %361 = vmatprep.subr.mxu0 0.0
    %362 = vmatpush1.msra.mxu0 0.0
    %363 = vmatprep.subr.mxu0 0.0
    %364 = vmatpush1.msra.mxu0 0.0
    %365 = vmatprep.subr.mxu0 0.0
    %366 = vmatpush1.msra.mxu0 0.0
    %367 = vmatprep.subr.mxu0 0.0
    %368 = vmatpush1.msra.mxu0 0.0
    %369 = vmatprep.subr.mxu0 0.0
    %370 = vmatpush1.msra.mxu0 0.0
    %371 = vmatprep.subr.mxu0 0.0
    %372 = vmatpush1.msra.mxu0 0.0
    %373 = vmatprep.subr.mxu0 0.0
    %374 = vmatpush1.msra.mxu0 0.0
    %375 = vmatprep.subr.mxu0 0.0
    %376 = vmatpush1.msra.mxu0 0.0
    %377 = vmatprep.subr.mxu0 0.0
    %378 = vmatpush1.msra.mxu0 0.0
    %379 = vmatprep.subr.mxu0 0.0
    %380 = vmatpush1.msra.mxu0 0.0
    %381 = vmatprep.subr.mxu0 0.0
    %382 = vmatpush1.msra.mxu0 0.0
    %383 = vmatprep.subr.mxu0 0.0
    %384 = vmatpush1.msra.mxu0 0.0
    %385 = vmatprep.mubr.f32.mxu0 0.0
    %386 = vmatmul.mubr.f32.gmra.mrb[0].mxu0 %v239
    %v387 = vpop.f32.mrb[0].mxu0
    %v388 = vadd.f32 0.0, %v387
    %v389 = vpop.f32.mrb[0].mxu0
    %v390 = vadd.f32 0.0, %v389
    %391 = vmatprep.mubr.f32.mxu0 0.0
    %392 = vmatmul.mubr.f32.gmra.mrb[0].mxu0 %v242
    %v393 = vpop.f32.mrb[0].mxu0
    %v394 = vadd.f32 0.0, %v393
    %v395 = vpop.f32.mrb[0].mxu0
    %v396 = vadd.f32 0.0, %v395
    %397 = vdwg.mxu0
    %v398 = vld [vmem:[#allocation2] sm:$0xff]
    %v399 = vld [vmem:[#allocation2 + $0x8] sm:$0xff]
    %v400 = vld [vmem:[#allocation2 + $0x10] sm:$0xff]
    %v401 = vld [vmem:[#allocation2 + $0x18] sm:$0xff]
    %v402 = vmul.f32 %v388, %v398
    %v403 = vmul.f32 %v390, %v399
    %v404 = vmul.f32 %v394, %v400
    %v405 = vmul.f32 %v396, %v401
    %v406 = vadd.f32 %v311, %v402
    %v407 = vadd.f32 %v313, %v403
    %v408 = vadd.f32 %v317, %v404
    %v409 = vadd.f32 %v319, %v405
    %v410 = vld [vmem:[%s4] sm:$0x3]
    %v412 = vlaneseq
    %v413 = vshrl.u32 %v412, 7
    %v414 = vsub.s32 0, %v413
    %v415 = vrot.slane %v410, %v414
    %v416 = vlaneseq
    %v417 = vshrl.u32 %v416, 7
    %v418 = vsub.s32 1, %v417
    %v419 = vrot.slane %v410, %v418
    %v422 = vadd.f32 %v406, %v415
    %v423 = vadd.f32 %v407, %v419
    %v424 = vadd.f32 %v408, %v415
    %v425 = vadd.f32 %v409, %v419
    %426 = vst [vmem:[%s5] sm:$0xff] %v422
    %427 = vst [vmem:[%s5 + $0x8] sm:$0xff] %v423
    %428 = vst [vmem:[%s5 + $0x10] sm:$0xff] %v424
    %429 = vst [vmem:[%s5 + $0x18] sm:$0xff] %v425
    // Predicated region
    $region26: #{forward.1} parent=1 // pred_check
      _
    $region27: #{forward.1} parent=1 // pred_check_branch
      %431 = sbr.rel (0) target = $region29
    $region28: #{forward.1} parent=1 // pred_region
      _
    $region29: #{forward.1} parent=1 // pred_fallthru
      _
    // Predicated region
    $region30: #{forward.1} parent=1 // pred_check
      _
    $region31: #{forward.1} parent=1 // pred_check_branch
      %433 = sbr.rel (0) target = $region33
    $region32: #{forward.1} parent=1 // pred_region
      _
    $region33: #{forward.1} parent=1 // pred_fallthru
      _
    %434 = vsyncpa [#allocation3], 1

</llo_original>
